<compile_context>
chip_gen: v7x
topology: tpu7x:2x2x1
jax: 0.10.0
libtpu: 0.0.40
codegen_flags: <defaults>
</compile_context>

<pallas_src>
import math

import jax
import jax.numpy as jnp
from jax.experimental import pallas as pl
from jax.experimental.pallas import tpu as pltpu

_DELTA = 1e-5                      # DiceBinaryLoss delta (denominator smoothing only)
_LANES = 128
_SUBLANES = 8
_TILE_ELEMS = _SUBLANES * _LANES   # 1024: pad granularity for the lane view
_TR_MIN, _TR_MAX = 512, 2048       # rows per tile when the sample doesn't fit whole
_PAD_LOGIT = -1.0e4                # sigmoid -> 0, bce -> 0: padded elems contribute 0


def _round_up(v, m):
    return ((v + m - 1) // m) * m


def _pick_tile_rows(rows):
    """Rows per grid step.  `rows` is always a multiple of 8.

    Single chunk when the whole sample fits (<= 2048 rows = 1 MiB f32/sample);
    otherwise the multiple-of-32 tile in [512, 2048] minimizing wasted compute
    in the (in-kernel masked) partial tail tile.
    """
    if rows <= _TR_MAX:
        return rows
    best_tr = _TR_MAX
    best_waste = (-rows) % _TR_MAX
    for tr in range(_TR_MAX, _TR_MIN - 1, -32):
        waste = (-rows) % tr
        if waste < best_waste:
            best_tr, best_waste = tr, waste
        if best_waste == 0:
            break
    return best_tr


def _make_loss_kernel(tr, rows, binary_targets):
    """Build the (1, tr, 128)-tile kernel; closes over static tile geometry."""
    n_tail = rows % tr   # 0 -> every tile is full, no masking needed

    def kernel(x_ref, y_ref, bce_ref, dice_ref, a_acc, b_acc, c_acc):
        chunk = pl.program_id(1)

        @pl.when(chunk == 0)
        def _init():
            a_acc[...] = jnp.zeros_like(a_acc)
            b_acc[...] = jnp.zeros_like(b_acc)
            c_acc[...] = jnp.zeros_like(c_acc)

        # All math in f32 regardless of storage dtype (v5e/v6e are HBM-bound;
        # bf16 math would only add converts on v5e).
        x = x_ref[0].astype(jnp.float32)          # (tr, 128)
        y = y_ref[0].astype(jnp.float32)          # (tr, 128)

        if n_tail:
            # Partial last tile: rows >= `rows` hold garbage (DMA is clamped to
            # the array bounds).  Neutralize them so the dice sums stay exact;
            # out-of-bounds output rows are dropped by Pallas on writeback.
            row = jax.lax.broadcasted_iota(jnp.int32, (tr, _LANES), 0)
            valid = (chunk * tr + row) < rows
            x = jnp.where(valid, x, _PAD_LOGIT)
            y = jnp.where(valid, y, 0.0)

        # Shared exponential: one EUP exp feeds both softplus and sigmoid.
        e = jnp.exp(-jnp.abs(x))                  # exp(-|x|)
        softplus = jnp.log(1.0 + e)

        # Numerically-stable BCEWithLogitsLoss(reduction='none') (torch's form):
        #   max(x, 0) - x*y + log(1 + exp(-|x|))
        bce = jnp.maximum(x, 0.0) - x * y + softplus
        bce_ref[0] = bce.astype(bce_ref.dtype)

        # sigmoid(x) = where(x >= 0, 1, e) / (1 + e)   (reuses e, exact)
        # TODO(synk): on v7x (compute-bound) switch to
        #             p = jnp.where(...) * pl.reciprocal(1.0 + e, approx=True).
        p = jnp.where(x >= 0.0, 1.0, e) / (1.0 + e)

        # (8, 128) accumulators: per-tile reduce is plain vreg adds over the
        # leading axis; sublane+lane reduction happens once, in finalize.
        def acc(v):
            return jnp.sum(v.reshape(tr // _SUBLANES, _SUBLANES, _LANES), axis=0)

        a_acc[...] += acc(p * y)
        b_acc[...] += acc(p * p)
        if binary_targets:
            c_acc[...] += acc(y)          # y in {0,1}  =>  sum(y*y) == sum(y)
        else:
            c_acc[...] += acc(y * y)

        @pl.when(chunk == pl.num_programs(1) - 1)
        def _finalize():
            a = jnp.sum(a_acc[...])
            b = jnp.sum(b_acc[...])
            c = jnp.sum(c_acc[...])
            dice = 1.0 - 2.0 * a / (b + c + _DELTA)
            dice_ref[...] = jnp.full((1, 1, _LANES), dice, dtype=dice_ref.dtype)

    return kernel


def dice_bce_loss_with_ohem(inputs, targets, keep_ratio=0.7, bce_ratio=0.5,
                            *, binary_targets=False,
                            bce_map_dtype=jnp.bfloat16):
    """DiceBCELossWithOHEM forward pass.

    binary_targets: targets are a {0,1} mask -> stream them narrow (bf16) and
        accumulate c = sum(y) instead of sum(y*y) (exact for binary masks).
    bce_map_dtype: storage dtype of the per-element BCE map handed to OHEM;
        bf16 halves the HBM writeback and the OHEM re-read (tiny perturbation
        of the OHEM mean).  Pass jnp.float32 to match the torch reference.
    """
    B = inputs.shape[0]
    N = math.prod(inputs.shape[1:])

    x = inputs.reshape(B, N)                         # keep native dtype
    y = targets.reshape(B, N)

    if binary_targets and y.dtype not in (jnp.bfloat16, jnp.float16,
                                          jnp.int8, jnp.uint8):
        y = y.astype(jnp.bfloat16)                   # exact for {0,1}; halves y read

    # Lane view: each sample becomes (rows, 128) with rows a multiple of 8.
    # Padding (and its jnp.pad copy) only triggers when N % 1024 != 0; padded
    # elements (logit -1e4, target 0) contribute exactly 0 to every dice sum
    # and a BCE of exactly 0, and are sliced off before OHEM.
    # TODO(synk): the unaligned-N case still pays one jnp.pad copy of x and y.
    pad = (-N) % _TILE_ELEMS
    if pad:
        x = jnp.pad(x, ((0, 0), (0, pad)), constant_values=_PAD_LOGIT)
        y = jnp.pad(y, ((0, 0), (0, pad)), constant_values=0)
    rows = (N + pad) // _LANES                       # multiple of 8
    tr = _pick_tile_rows(rows)
    n_chunks = -(-rows // tr)

    x3 = x.reshape(B, rows, _LANES)
    y3 = y.reshape(B, rows, _LANES)

    bce_elem, dice_out = pl.pallas_call(
        _make_loss_kernel(tr, rows, binary_targets),
        out_shape=(
            jax.ShapeDtypeStruct((B, rows, _LANES), bce_map_dtype),  # BCE map
            jax.ShapeDtypeStruct((B, 1, _LANES), jnp.float32),       # dice/sample
        ),
        grid=(B, n_chunks),
        in_specs=[
            pl.BlockSpec((1, tr, _LANES), lambda b, c: (b, c, 0)),
            pl.BlockSpec((1, tr, _LANES), lambda b, c: (b, c, 0)),
        ],
        out_specs=(
            pl.BlockSpec((1, tr, _LANES), lambda b, c: (b, c, 0)),
            pl.BlockSpec((1, 1, _LANES), lambda b, c: (b, 0, 0)),
        ),
        scratch_shapes=[
            pltpu.VMEM((_SUBLANES, _LANES), jnp.float32),   # a = sum(p*y) partials
            pltpu.VMEM((_SUBLANES, _LANES), jnp.float32),   # b = sum(p*p) partials
            pltpu.VMEM((_SUBLANES, _LANES), jnp.float32),   # c = sum(y*y) partials
        ],
        compiler_params=pltpu.CompilerParams(
            dimension_semantics=("parallel", "arbitrary")),
        # TODO(synk): on v7x with small/odd B, shard the chunk (reduction) axis
        # across the two TensorCores (grid=(B, 2, n_chunks//2)) with per-core
        # partial dice sums combined in the wrapper.
    )(x3, y3)

    dice_per_sample = dice_out[:, 0, 0]                                # (B,)

    bce_flat = bce_elem.reshape(B, rows * _LANES)
    if pad:
        bce_flat = bce_flat[:, :N]
    bce_flat = bce_flat.reshape(-1).astype(jnp.float32)

    # OHEM: sort descending + keep top-k + mean (matches torch exactly).
    # TODO(synk): for real segmentation sizes, replace the exact 70%-of-N top_k
    # (effectively a full sort plus a full re-read of the BCE map) with
    # lax.approx_max_k or a kernel-side histogram -> quantile threshold ->
    # masked-mean two-pass; it dominates end-to-end time for large maps.
    k_bce = max(1, int(keep_ratio * bce_flat.shape[0]))
    bce_ohem = jnp.mean(jax.lax.top_k(bce_flat, k_bce)[0])

    k_dice = max(1, int(keep_ratio * B))
    dice_ohem = jnp.mean(jax.lax.top_k(dice_per_sample, k_dice)[0])

    return bce_ratio * bce_ohem + (1.0 - bce_ratio) * dice_ohem


def _reference_loss(inputs, targets, keep_ratio=0.7, bce_ratio=0.5):
    """Pure-JAX reference mirroring the PyTorch module (f32 throughout)."""
    x = inputs.reshape(inputs.shape[0], -1).astype(jnp.float32)
    y = targets.reshape(targets.shape[0], -1).astype(jnp.float32)
    bce = jnp.maximum(x, 0.0) - x * y + jnp.log1p(jnp.exp(-jnp.abs(x)))
    p = jax.nn.sigmoid(x)
    a = jnp.sum(p * y, axis=1)
    b = jnp.sum(p * p, axis=1)
    c = jnp.sum(y * y, axis=1)
    dice = 1.0 - 2.0 * a / (b + c + _DELTA)

    def ohem(v):
        v = v.reshape(-1)
        k = max(1, int(keep_ratio * v.shape[0]))
        return jnp.mean(jax.lax.top_k(v, k)[0])

    return bce_ratio * ohem(bce) + (1.0 - bce_ratio) * ohem(dice)


if __name__ == "__main__":
    key = jax.random.PRNGKey(0)
    kx, kt = jax.random.split(key)
    B, C, H, W = 2, 4, 16, 16
    inputs = jax.random.normal(kx, (B, C, H, W), dtype=jnp.float32)        # logits
    targets = (jax.random.uniform(kt, (B, C, H, W)) > 0.5).astype(jnp.float32)

    loss = dice_bce_loss_with_ohem(inputs, targets, keep_ratio=0.7,
                                   bce_ratio=0.5, binary_targets=True)
    loss = jax.block_until_ready(loss)

    ref = jax.block_until_ready(_reference_loss(inputs, targets, 0.7, 0.5))
    assert bool(jnp.isfinite(loss)), "loss is not finite"
    assert abs(float(loss) - float(ref)) < 3e-2, (float(loss), float(ref))
    print("KERNEL_OK")
</pallas_src>

<mosaic_0001>
module attributes {stable_mosaic.version = 11 : i64} {
  func.func @kernel(%arg0: i32, %arg1: i32, %arg2: memref<1x8x128xf32, #tpu.memory_space<vmem>>, %arg3: memref<1x8x128xbf16, #tpu.memory_space<vmem>>, %arg4: memref<1x8x128xbf16, #tpu.memory_space<vmem>>, %arg5: memref<1x1x128xf32, #tpu.memory_space<vmem>>, %arg6: memref<8x128xf32, #tpu.memory_space<vmem>>, %arg7: memref<8x128xf32, #tpu.memory_space<vmem>>, %arg8: memref<8x128xf32, #tpu.memory_space<vmem>>) attributes {dimension_semantics = [#tpu.dimension_semantics<parallel>, #tpu.dimension_semantics<arbitrary>], iteration_bounds = array<i64: 2, 1>, scalar_prefetch = 0 : i64, scratch_operands = 3 : i64, tpu.core_type = #tpu.core_type<tc>, window_params = [{transform_indices = @transform_0, window_bounds = array<i64: 1, 8, 128>}, {transform_indices = @transform_1, window_bounds = array<i64: 1, 8, 128>}, {transform_indices = @transform_2, window_bounds = array<i64: 1, 8, 128>}, {transform_indices = @transform_3, window_bounds = array<i64: 1, 1, 128>}]} {
    %c0_i32 = arith.constant 0 : i32
    %0 = arith.cmpi eq, %arg1, %c0_i32 : i32
    %1 = arith.extui %0 : i1 to i32
    %c0_i32_0 = arith.constant 0 : i32
    %2 = arith.cmpi ne, %1, %c0_i32_0 : i32
    scf.if %2 {
      %cst_31 = arith.constant 0.000000e+00 : f32
      %51 = vector.broadcast %cst_31 : f32 to vector<8x128xf32>
      %c0_32 = arith.constant 0 : index
      %c0_33 = arith.constant 0 : index
      %52 = vector.load %arg6[%c0_32, %c0_33] : memref<8x128xf32, #tpu.memory_space<vmem>>, vector<8x128xf32>
      tpu.vector_store %arg6[%c0_32, %c0_33], %51 {strides = array<i32>} : memref<8x128xf32, #tpu.memory_space<vmem>>, vector<8x128xf32>,
      %cst_34 = arith.constant 0.000000e+00 : f32
      %53 = vector.broadcast %cst_34 : f32 to vector<8x128xf32>
      %c0_35 = arith.constant 0 : index
      %c0_36 = arith.constant 0 : index
      %54 = vector.load %arg7[%c0_35, %c0_36] : memref<8x128xf32, #tpu.memory_space<vmem>>, vector<8x128xf32>
      tpu.vector_store %arg7[%c0_35, %c0_36], %53 {strides = array<i32>} : memref<8x128xf32, #tpu.memory_space<vmem>>, vector<8x128xf32>,
      %cst_37 = arith.constant 0.000000e+00 : f32
      %55 = vector.broadcast %cst_37 : f32 to vector<8x128xf32>
      %c0_38 = arith.constant 0 : index
      %c0_39 = arith.constant 0 : index
      %56 = vector.load %arg8[%c0_38, %c0_39] : memref<8x128xf32, #tpu.memory_space<vmem>>, vector<8x128xf32>
      tpu.vector_store %arg8[%c0_38, %c0_39], %55 {strides = array<i32>} : memref<8x128xf32, #tpu.memory_space<vmem>>, vector<8x128xf32>,
    } else {
    }
    %c0 = arith.constant 0 : index
    %c0_1 = arith.constant 0 : index
    %c0_2 = arith.constant 0 : index
    %3 = vector.load %arg2[%c0, %c0_1, %c0_2] : memref<1x8x128xf32, #tpu.memory_space<vmem>>, vector<1x8x128xf32>
    %4 = vector.shape_cast %3 : vector<1x8x128xf32> to vector<8x128xf32>
    %c0_3 = arith.constant 0 : index
    %c0_4 = arith.constant 0 : index
    %c0_5 = arith.constant 0 : index
    %5 = vector.load %arg3[%c0_3, %c0_4, %c0_5] : memref<1x8x128xbf16, #tpu.memory_space<vmem>>, vector<1x8x128xbf16>
    %6 = vector.shape_cast %5 : vector<1x8x128xbf16> to vector<8x128xbf16>
    %7 = arith.extf %6 : vector<8x128xbf16> to vector<8x128xf32>
    %8 = math.absf %4 : vector<8x128xf32>
    %cst = arith.constant 0.000000e+00 : f32
    %9 = vector.broadcast %cst : f32 to vector<8x128xf32>
    %10 = arith.subf %9, %8 : vector<8x128xf32>
    %11 = math.exp %10 : vector<8x128xf32>
    %cst_6 = arith.constant 1.000000e+00 : f32
    %12 = vector.broadcast %cst_6 : f32 to vector<8x128xf32>
    %13 = arith.addf %12, %11 : vector<8x128xf32>
    %14 = math.log %13 : vector<8x128xf32>
    %cst_7 = arith.constant 0.000000e+00 : f32
    %15 = vector.broadcast %cst_7 : f32 to vector<8x128xf32>
    %16 = arith.maximumf %4, %15 : vector<8x128xf32>
    %17 = arith.mulf %4, %7 : vector<8x128xf32>
    %18 = arith.subf %16, %17 : vector<8x128xf32>
    %19 = arith.addf %18, %14 : vector<8x128xf32>
    %20 = arith.truncf %19 : vector<8x128xf32> to vector<8x128xbf16>
    %c0_8 = arith.constant 0 : index
    %c0_9 = arith.constant 0 : index
    %c0_10 = arith.constant 0 : index
    %21 = vector.load %arg4[%c0_8, %c0_9, %c0_10] : memref<1x8x128xbf16, #tpu.memory_space<vmem>>, vector<1x8x128xbf16>
    %22 = vector.shape_cast %21 : vector<1x8x128xbf16> to vector<8x128xbf16>
    %23 = vector.shape_cast %20 : vector<8x128xbf16> to vector<1x8x128xbf16>
    tpu.vector_store %arg4[%c0_8, %c0_9, %c0_10], %23 {strides = array<i32>} : memref<1x8x128xbf16, #tpu.memory_space<vmem>>, vector<1x8x128xbf16>,
    %cst_11 = arith.constant 0.000000e+00 : f32
    %24 = vector.broadcast %cst_11 : f32 to vector<8x128xf32>
    %25 = arith.cmpf oge, %4, %24 : vector<8x128xf32>
    %cst_12 = arith.constant 1.000000e+00 : f32
    %26 = vector.broadcast %cst_12 : f32 to vector<8x128xf32>
    %27 = arith.select %25, %26, %11 : vector<8x128xi1>, vector<8x128xf32>
    %cst_13 = arith.constant 1.000000e+00 : f32
    %28 = vector.broadcast %cst_13 : f32 to vector<8x128xf32>
    %29 = arith.addf %28, %11 : vector<8x128xf32>
    %30 = arith.divf %27, %29 : vector<8x128xf32>
    %c0_14 = arith.constant 0 : index
    %c0_15 = arith.constant 0 : index
    %31 = vector.load %arg6[%c0_14, %c0_15] : memref<8x128xf32, #tpu.memory_space<vmem>>, vector<8x128xf32>
    %32 = arith.mulf %30, %7 : vector<8x128xf32>
    %33 = vector.shape_cast %32 : vector<8x128xf32> to vector<1x8x128xf32>
    %cst_16 = arith.constant dense<0.000000e+00> : vector<8x128xf32>
    %34 = vector.multi_reduction <add>, %33, %cst_16 [0] : vector<1x8x128xf32> to vector<8x128xf32>
    %35 = arith.addf %31, %34 : vector<8x128xf32>
    %c0_17 = arith.constant 0 : index
    %c0_18 = arith.constant 0 : index
    %36 = vector.load %arg6[%c0_17, %c0_18] : memref<8x128xf32, #tpu.memory_space<vmem>>, vector<8x128xf32>
    tpu.vector_store %arg6[%c0_17, %c0_18], %35 {strides = array<i32>} : memref<8x128xf32, #tpu.memory_space<vmem>>, vector<8x128xf32>,
    %c0_19 = arith.constant 0 : index
    %c0_20 = arith.constant 0 : index
    %37 = vector.load %arg7[%c0_19, %c0_20] : memref<8x128xf32, #tpu.memory_space<vmem>>, vector<8x128xf32>
    %38 = arith.mulf %30, %30 : vector<8x128xf32>
    %39 = vector.shape_cast %38 : vector<8x128xf32> to vector<1x8x128xf32>
    %cst_21 = arith.constant dense<0.000000e+00> : vector<8x128xf32>
    %40 = vector.multi_reduction <add>, %39, %cst_21 [0] : vector<1x8x128xf32> to vector<8x128xf32>
    %41 = arith.addf %37, %40 : vector<8x128xf32>
    %c0_22 = arith.constant 0 : index
    %c0_23 = arith.constant 0 : index
    %42 = vector.load %arg7[%c0_22, %c0_23] : memref<8x128xf32, #tpu.memory_space<vmem>>, vector<8x128xf32>
    tpu.vector_store %arg7[%c0_22, %c0_23], %41 {strides = array<i32>} : memref<8x128xf32, #tpu.memory_space<vmem>>, vector<8x128xf32>,
    %c0_24 = arith.constant 0 : index
    %c0_25 = arith.constant 0 : index
    %43 = vector.load %arg8[%c0_24, %c0_25] : memref<8x128xf32, #tpu.memory_space<vmem>>, vector<8x128xf32>
    %44 = vector.shape_cast %7 : vector<8x128xf32> to vector<1x8x128xf32>
    %cst_26 = arith.constant dense<0.000000e+00> : vector<8x128xf32>
    %45 = vector.multi_reduction <add>, %44, %cst_26 [0] : vector<1x8x128xf32> to vector<8x128xf32>
    %46 = arith.addf %43, %45 : vector<8x128xf32>
    %c0_27 = arith.constant 0 : index
    %c0_28 = arith.constant 0 : index
    %47 = vector.load %arg8[%c0_27, %c0_28] : memref<8x128xf32, #tpu.memory_space<vmem>>, vector<8x128xf32>
    tpu.vector_store %arg8[%c0_27, %c0_28], %46 {strides = array<i32>} : memref<8x128xf32, #tpu.memory_space<vmem>>, vector<8x128xf32>,
    %c0_i32_29 = arith.constant 0 : i32
    %48 = arith.cmpi eq, %arg1, %c0_i32_29 : i32
    %49 = arith.extui %48 : i1 to i32
    %c0_i32_30 = arith.constant 0 : i32
    %50 = arith.cmpi ne, %49, %c0_i32_30 : i32
    scf.if %50 {
      %c0_31 = arith.constant 0 : index
      %c0_32 = arith.constant 0 : index
      %51 = vector.load %arg6[%c0_31, %c0_32] : memref<8x128xf32, #tpu.memory_space<vmem>>, vector<8x128xf32>
      %52 = vector.shape_cast %51 : vector<8x128xf32> to vector<1x8x128xf32>
      %cst_33 = arith.constant dense<0.000000e+00> : vector<1xf32>
      %53 = vector.multi_reduction <add>, %52, %cst_33 [1, 2] : vector<1x8x128xf32> to vector<1xf32>
      %54 = vector.shape_cast %53 : vector<1xf32> to vector<1x1x1xf32>
      %55 = vector.extract %54[0, 0, 0] : f32 from vector<1x1x1xf32>
      %c0_34 = arith.constant 0 : index
      %c0_35 = arith.constant 0 : index
      %56 = vector.load %arg7[%c0_34, %c0_35] : memref<8x128xf32, #tpu.memory_space<vmem>>, vector<8x128xf32>
      %57 = vector.shape_cast %56 : vector<8x128xf32> to vector<1x8x128xf32>
      %cst_36 = arith.constant dense<0.000000e+00> : vector<1xf32>
      %58 = vector.multi_reduction <add>, %57, %cst_36 [1, 2] : vector<1x8x128xf32> to vector<1xf32>
      %59 = vector.shape_cast %58 : vector<1xf32> to vector<1x1x1xf32>
      %60 = vector.extract %59[0, 0, 0] : f32 from vector<1x1x1xf32>
      %c0_37 = arith.constant 0 : index
      %c0_38 = arith.constant 0 : index
      %61 = vector.load %arg8[%c0_37, %c0_38] : memref<8x128xf32, #tpu.memory_space<vmem>>, vector<8x128xf32>
      %62 = vector.shape_cast %61 : vector<8x128xf32> to vector<1x8x128xf32>
      %cst_39 = arith.constant dense<0.000000e+00> : vector<1xf32>
      %63 = vector.multi_reduction <add>, %62, %cst_39 [1, 2] : vector<1x8x128xf32> to vector<1xf32>
      %64 = vector.shape_cast %63 : vector<1xf32> to vector<1x1x1xf32>
      %65 = vector.extract %64[0, 0, 0] : f32 from vector<1x1x1xf32>
      %cst_40 = arith.constant 2.000000e+00 : f32
      %66 = arith.mulf %cst_40, %55 : f32
      %67 = arith.addf %60, %65 : f32
      %cst_41 = arith.constant 9.99999974E-6 : f32
      %68 = arith.addf %67, %cst_41 : f32
      %69 = arith.divf %66, %68 : f32
      %cst_42 = arith.constant 1.000000e+00 : f32
      %70 = arith.subf %cst_42, %69 : f32
      %71 = vector.broadcast %70 : f32 to vector<1x1x128xf32>
      %c0_43 = arith.constant 0 : index
      %c0_44 = arith.constant 0 : index
      %c0_45 = arith.constant 0 : index
      %72 = vector.load %arg5[%c0_43, %c0_44, %c0_45] : memref<1x1x128xf32, #tpu.memory_space<vmem>>, vector<1x1x128xf32>
      tpu.vector_store %arg5[%c0_43, %c0_44, %c0_45], %71 {strides = array<i32>} : memref<1x1x128xf32, #tpu.memory_space<vmem>>, vector<1x1x128xf32>,
    } else {
    }
    return
  }
  func.func @transform_0(%arg0: i32, %arg1: i32) -> (i32, i32, i32) {
    %c0_i32 = arith.constant 0 : i32
    %c0_i32_0 = arith.constant 0 : i32
    return %arg0, %arg1, %c0_i32 : i32, i32, i32
  }
  func.func @transform_1(%arg0: i32, %arg1: i32) -> (i32, i32, i32) {
    %c0_i32 = arith.constant 0 : i32
    %c0_i32_0 = arith.constant 0 : i32
    return %arg0, %arg1, %c0_i32 : i32, i32, i32
  }
  func.func @transform_2(%arg0: i32, %arg1: i32) -> (i32, i32, i32) {
    %c0_i32 = arith.constant 0 : i32
    %c0_i32_0 = arith.constant 0 : i32
    return %arg0, %arg1, %c0_i32 : i32, i32, i32
  }
  func.func @transform_3(%arg0: i32, %arg1: i32) -> (i32, i32, i32) {
    %c0_i32 = arith.constant 0 : i32
    %c0_i32_0 = arith.constant 0 : i32
    %c0_i32_1 = arith.constant 0 : i32
    return %arg0, %c0_i32, %c0_i32_0 : i32, i32, i32
  }
}

</mosaic_0001>

<llo_original>
// kernel: tpu_custom_call.1
$region0: #{tpu_custom_call.1}
  #allocation0 [shape = 'u32[]', space=smem, size = 0x4, offset = 0x4, fixed_abs, tag = 'smem constant byte address 0x4 - core index']
  #allocation1 [shape = 'u32[144,128]{1,0:T(1,128)}', space=vmem, size = 0x12000, scoped, tag = 'internal scratch']
  #allocation2 [shape = 'f32[8,128]{1,0:T(8,128)}', space=vmem, size = 0x1000, scoped, tag = 'scratch operand']
  #allocation3 [shape = 'f32[8,128]{1,0:T(8,128)}', space=vmem, size = 0x1000, scoped, tag = 'scratch operand']
  #allocation4 [shape = 'f32[8,128]{1,0:T(8,128)}', space=vmem, size = 0x1000, scoped, tag = 'scratch operand']
  %s0 = inlined_call_operand.hbm [shape: f32[2,8,128], index: 0, kind: input, shape index: {}]
  %s1 = inlined_call_operand.hbm [shape: bf16[2,8,128], index: 1, kind: input, shape index: {}]
  %s2 = inlined_call_operand.hbm [shape: bf16[2,8,128], index: 2, kind: output, shape index: {0}]
  %s3 = inlined_call_operand.hbm [shape: f32[2,1,128], index: 3, kind: output, shape index: {1}]
  %4 = xla_tuple %s2, %s3
  %s5 = sld [smem:[#allocation0]]
  $region65: #{tpu_custom_call.1} parent=0
    _
  %s7 = ssub.s32 1, %s5
  %s8 = scalar_select 0, %s7, %s5
  $region1: #{tpu_custom_call.1} parent=0
    #allocation5 [shape = 'u8[8192]{0}', space=vmem, size = 0x2000, scoped, tag = 'input window, operand 0']
    #allocation6 [shape = 's32[2]{0}', space=sflag, size = 0x8, scoped, tag = 'scoped memory for tpu_custom_call.1']
    #allocation7 [shape = 's32[2]{0}', space=sflag, size = 0x8, scoped, tag = 'scoped memory for tpu_custom_call.1']
    #allocation8 [shape = 'u8[4096]{0}', space=vmem, size = 0x1000, scoped, tag = 'input window, operand 1']
    #allocation9 [shape = 's32[2]{0}', space=sflag, size = 0x8, scoped, tag = 'scoped memory for tpu_custom_call.1']
    #allocation10 [shape = 'u8[4096]{0}', space=vmem, size = 0x1000, scoped, tag = 'output window, operand 0']
    #allocation11 [shape = 'u8[1024]{0}', space=vmem, size = 0x400, scoped, tag = 'output window, operand 1']
    #allocation12 [shape = 's32[2]{0}', space=sflag, size = 0x8, scoped, tag = 'scoped memory for tpu_custom_call.1']
    %9 = vsyncpa [#allocation6], 0
    %s10 = scalar_lea.sflag [#allocation6], 1
    %11 = vsyncpa %s10, 0
    %12 = vsyncpa [#allocation9], 0
    %s13 = scalar_lea.sflag [#allocation9], 1
    %14 = vsyncpa %s13, 0
    %15 = vsyncpa [#allocation7], 0
    %s16 = scalar_lea.sflag [#allocation7], 1
    %17 = vsyncpa %s16, 0
    %18 = vsyncpa [#allocation12], 0
    %s19 = scalar_lea.sflag [#allocation12], 1
    %20 = vsyncpa %s19, 0
    loop: start=0, step=1, limit=4
    $region2: #{tpu_custom_call.1} parent=1 // loop_pre_header
      _
    $region3: #{tpu_custom_call.1} parent=1 // loop_header
      %s22 = sphi 0, %s26
      %p23 = scmp.ge.s32.totalorder %s22, 4
      %s29 = sphi 0, %s41
      %s30 = sphi 0, %s37
      %s31 = sphi 0, %s29
      %s32 = sphi 0, %s30
      %s33 = sphi 0, %s31
      %s34 = sphi 0, %s32
      %s46 = sphi 0, %s48
      %s49 = sphi 0, %s46
      %s50 = sphi 0, %s49
      %s66 = sphi 0, %s50
      %s74 = sphi 0, %s76
      %s77 = sphi 0, %s74
      %s78 = sphi 0, %s77
      %s94 = sphi 0, %s78
      %s102 = sphi 0, %s104
      %s105 = sphi 0, %s102
      %s106 = sphi 0, %s105
      %s122 = sphi 0, %s106
      %s128 = sphi 0, %s130
      %s131 = sphi 0, %s128
      %s132 = sphi 0, %s131
      %s148 = sphi 0, %s132
    $region4: #{tpu_custom_call.1} parent=1 // loop_header_branch
      %25 = sbr.rel (%p23) target = $region8
    $region5: #{tpu_custom_call.1} parent=1 // loop_body
      %s27 = ssub.s32 %s22, 1
      %s28 = ssub.s32 %s22, 2
      %s35 = sadd.s32 1, %s30
      %p36 = scmp.ge.s32.totalorder %s35, 1
      %s37 = scalar_select %p36, 0, %s35
      %s38 = sadd.s32 1, %s29
      %s39 = scalar_select %p36, %s38, %s29
      %p40 = scmp.ge.s32.totalorder %s39, 2
      %s41 = scalar_select %p40, 0, %s39
      %s42 = ssub.s32 %s29, %s41
      %s43 = ssub.s32 %s30, %s37
      %s44 = sor.u32 %s42, %s43
      %p45 = scmp.eq.s32.totalorder %s44, 0
      %s47 = sadd.s32 %s46, 1
      %s48 = scalar_select %p45, %s46, %s47
      %p51 = pneg %p45
      %p52 = scmp.eq.s32.totalorder %s22, 1
      %p53 = por %p51, %p52
      %p54 = scmp.ne.s32.totalorder %s46, %s49
      %p55 = scmp.eq.s32.totalorder %s22, 0
      %p56 = por %p54, %p55
      %p57 = scmp.ne.s32.totalorder %s46, %s49
      %p58 = scmp.eq.s32.totalorder %s27, 1
      %p59 = por %p57, %p58
      %p60 = scmp.ne.s32.totalorder %s49, %s50
      %p61 = scmp.eq.s32.totalorder %s27, 0
      %p62 = por %p60, %p61
      %p63 = scmp.ne.s32.totalorder %s49, %s50
      %p64 = scmp.eq.s32.totalorder %s28, 1
      %p65 = por %p63, %p64
      %p67 = scmp.ne.s32.totalorder %s50, %s66
      %p68 = scmp.eq.s32.totalorder %s28, 0
      %p69 = por %p67, %p68
      %s70 = ssub.s32 %s29, %s41
      %s71 = ssub.s32 %s30, %s37
      %s72 = sor.u32 %s70, %s71
      %p73 = scmp.eq.s32.totalorder %s72, 0
      %s75 = sadd.s32 %s74, 1
      %s76 = scalar_select %p73, %s74, %s75
      %p79 = pneg %p73
      %p80 = scmp.eq.s32.totalorder %s22, 1
      %p81 = por %p79, %p80
      %p82 = scmp.ne.s32.totalorder %s74, %s77
      %p83 = scmp.eq.s32.totalorder %s22, 0
      %p84 = por %p82, %p83
      %p85 = scmp.ne.s32.totalorder %s74, %s77
      %p86 = scmp.eq.s32.totalorder %s27, 1
      %p87 = por %p85, %p86
      %p88 = scmp.ne.s32.totalorder %s77, %s78
      %p89 = scmp.eq.s32.totalorder %s27, 0
      %p90 = por %p88, %p89
      %p91 = scmp.ne.s32.totalorder %s77, %s78
      %p92 = scmp.eq.s32.totalorder %s28, 1
      %p93 = por %p91, %p92
      %p95 = scmp.ne.s32.totalorder %s78, %s94
      %p96 = scmp.eq.s32.totalorder %s28, 0
      %p97 = por %p95, %p96
      %s98 = ssub.s32 %s29, %s41
      %s99 = ssub.s32 %s30, %s37
      %s100 = sor.u32 %s98, %s99
      %p101 = scmp.eq.s32.totalorder %s100, 0
      %s103 = sadd.s32 %s102, 1
      %s104 = scalar_select %p101, %s102, %s103
      %p107 = pneg %p101
      %p108 = scmp.eq.s32.totalorder %s22, 1
      %p109 = por %p107, %p108
      %p110 = scmp.ne.s32.totalorder %s102, %s105
      %p111 = scmp.eq.s32.totalorder %s22, 0
      %p112 = por %p110, %p111
      %p113 = scmp.ne.s32.totalorder %s102, %s105
      %p114 = scmp.eq.s32.totalorder %s27, 1
      %p115 = por %p113, %p114
      %p116 = scmp.ne.s32.totalorder %s105, %s106
      %p117 = scmp.eq.s32.totalorder %s27, 0
      %p118 = por %p116, %p117
      %p119 = scmp.ne.s32.totalorder %s105, %s106
      %p120 = scmp.eq.s32.totalorder %s28, 1
      %p121 = por %p119, %p120
      %p123 = scmp.ne.s32.totalorder %s106, %s122
      %p124 = scmp.eq.s32.totalorder %s28, 0
      %p125 = por %p123, %p124
      %s126 = ssub.s32 %s29, %s41
      %p127 = scmp.eq.s32.totalorder %s126, 0
      %s129 = sadd.s32 %s128, 1
      %s130 = scalar_select %p127, %s128, %s129
      %p133 = pneg %p127
      %p134 = scmp.eq.s32.totalorder %s22, 1
      %p135 = por %p133, %p134
      %p136 = scmp.ne.s32.totalorder %s128, %s131
      %p137 = scmp.eq.s32.totalorder %s22, 0
      %p138 = por %p136, %p137
      %p139 = scmp.ne.s32.totalorder %s128, %s131
      %p140 = scmp.eq.s32.totalorder %s27, 1
      %p141 = por %p139, %p140
      %p142 = scmp.ne.s32.totalorder %s131, %s132
      %p143 = scmp.eq.s32.totalorder %s27, 0
      %p144 = por %p142, %p143
      %p145 = scmp.ne.s32.totalorder %s131, %s132
      %p146 = scmp.eq.s32.totalorder %s28, 1
      %p147 = por %p145, %p146
      %p149 = scmp.ne.s32.totalorder %s132, %s148
      %p150 = scmp.eq.s32.totalorder %s28, 0
      %p151 = por %p149, %p150
      %p152 = scmp.le.s32.totalorder 1, %s22
      %p153 = scmp.lt.s32.totalorder %s22, 3
      %p154 = pnand %p152, %p153
      %p155 = pneg %p154
      // Predicated region
      $region9: #{tpu_custom_call.1} parent=5 // pred_check
        _
      $region10: #{tpu_custom_call.1} parent=5 // pred_check_branch
        %157 = sbr.rel (%p154) target = $region12
      $region11: #{tpu_custom_call.1} parent=5 // pred_region
        %s158 = ssub.s32 %s22, 1
      $region12: #{tpu_custom_call.1} parent=5 // pred_fallthru
        _
      %p159 = scmp.lt.s32.totalorder %s22, 2
      // Predicated region
      $region13: #{tpu_custom_call.1} parent=5 // pred_check
        %p160 = pneg %p159
      $region14: #{tpu_custom_call.1} parent=5 // pred_check_branch
        %162 = sbr.rel (%p160) target = $region16
      $region15: #{tpu_custom_call.1} parent=5 // pred_region
        // Predicated region
        $region17: #{tpu_custom_call.1} parent=15 // pred_check
          %p163 = pneg %p56
        $region18: #{tpu_custom_call.1} parent=15 // pred_check_branch
          %165 = sbr.rel (%p163) target = $region20
        $region19: #{tpu_custom_call.1} parent=15 // pred_region
          %s166 = sand.u32 %s46, 1
          %s167 = scalar_lea.sflag [#allocation6], %s166
          %s168 = sand.u32 %s46, 1
          %s169 = smul.addr %s168, 8
          %s170 = scalar_lea.vmem [#allocation5], %s169
          %s172 = ssub.s32 128, 128
          %173 = vsyncadd %s167, %s172
          %s174 = sadd.s32 %s30, %s29
          %s175 = smul.addr %s174, 128
          %s176 = scalar_lea.hbm %s0, %s175
          %s178 = sshll.u32 %s170, 4
          %s179 = int_to_ptr.vmem [resolvable:$true] %s178
          %181 = dma.hbm_to_vmem [thread:$0]  %s176, 128, %s179, %s167
        $region20: #{tpu_custom_call.1} parent=15 // pred_fallthru
          _
        // Predicated region
        $region21: #{tpu_custom_call.1} parent=15 // pred_check
          %p182 = pneg %p84
        $region22: #{tpu_custom_call.1} parent=15 // pred_check_branch
          %184 = sbr.rel (%p182) target = $region24
        $region23: #{tpu_custom_call.1} parent=15 // pred_region
          %s185 = sand.u32 %s74, 1
          %s186 = scalar_lea.sflag [#allocation9], %s185
          %s187 = sand.u32 %s74, 1
          %s188 = smul.addr %s187, 4
          %s189 = scalar_lea.vmem [#allocation8], %s188
          %s191 = ssub.s32 64, 64
          %192 = vsyncadd %s186, %s191
          %s193 = sadd.s32 %s30, %s29
          %s194 = smul.addr %s193, 64
          %s195 = scalar_lea.hbm %s1, %s194
          %s197 = sshll.u32 %s189, 4
          %s198 = int_to_ptr.vmem [resolvable:$true] %s197
          %200 = dma.hbm_to_vmem [thread:$0]  %s195, 64, %s198, %s186
        $region24: #{tpu_custom_call.1} parent=15 // pred_fallthru
          _
      $region16: #{tpu_custom_call.1} parent=5 // pred_fallthru
        _
      %p201 = scmp.le.s32.totalorder 1, %s22
      %p202 = scmp.lt.s32.totalorder %s22, 3
      %p203 = pnand %p201, %p202
      %p204 = pneg %p203
      // Predicated region
      $region25: #{tpu_custom_call.1} parent=5 // pred_check
        _
      $region26: #{tpu_custom_call.1} parent=5 // pred_check_branch
        %206 = sbr.rel (%p203) target = $region28
      $region27: #{tpu_custom_call.1} parent=5 // pred_region
        %s207 = ssub.s32 %s22, 1
        %s208 = sand.u32 %s49, 1
        %s209 = scalar_lea.sflag [#allocation6], %s208
        %s210 = sand.u32 %s49, 1
        %s211 = smul.addr %s210, 8
        %s212 = scalar_lea.vmem [#allocation5], %s211
        // Predicated region
        $region29: #{tpu_custom_call.1} parent=27 // pred_check
          %p213 = pneg %p62
        $region30: #{tpu_custom_call.1} parent=27 // pred_check_branch
          %215 = sbr.rel (%p213) target = $region32
        $region31: #{tpu_custom_call.1} parent=27 // pred_region
          %216 = dma.done %s209, 128
        $region32: #{tpu_custom_call.1} parent=27 // pred_fallthru
          _
        %s217 = sand.u32 %s77, 1
        %s218 = scalar_lea.sflag [#allocation9], %s217
        %s219 = sand.u32 %s77, 1
        %s220 = smul.addr %s219, 4
        %s221 = scalar_lea.vmem [#allocation8], %s220
        // Predicated region
        $region33: #{tpu_custom_call.1} parent=27 // pred_check
          %p222 = pneg %p90
        $region34: #{tpu_custom_call.1} parent=27 // pred_check_branch
          %224 = sbr.rel (%p222) target = $region36
        $region35: #{tpu_custom_call.1} parent=27 // pred_region
          %225 = dma.done %s218, 64
        $region36: #{tpu_custom_call.1} parent=27 // pred_fallthru
          _
        %s226 = sand.u32 %s49, 1
        %s227 = scalar_lea.sflag [#allocation6], %s226
        %s228 = sand.u32 %s49, 1
        %s229 = smul.addr %s228, 8
        %s230 = scalar_lea.vmem [#allocation5], %s229
        %p231 = pneg %p62
        %p232 = pneg %p59
        %s233 = sand.u32 %s77, 1
        %s234 = scalar_lea.sflag [#allocation9], %s233
        %s235 = sand.u32 %s77, 1
        %s236 = smul.addr %s235, 4
        %s237 = scalar_lea.vmem [#allocation8], %s236
        %p238 = pneg %p90
        %p239 = pneg %p87
        %p240 = pneg %p118
        %p241 = pneg %p115
        %s242 = sand.u32 %s105, 1
        %s243 = scalar_lea.sflag [#allocation7], %s242
        %s244 = sand.u32 %s105, 1
        %s245 = smul.addr %s244, 4
        %s246 = scalar_lea.vmem [#allocation10], %s245
        %p247 = pneg %p144
        %p248 = pneg %p141
        %s249 = sand.u32 %s131, 1
        %s250 = scalar_lea.sflag [#allocation12], %s249
        %s251 = sand.u32 %s131, 1
        %s252 = scalar_lea.vmem [#allocation11], %s251
        %p253 = scmp.eq.s32.totalorder %s32, 0
        // Predicated region
        $region37: #{tpu_custom_call.1} parent=27 // pred_check
          %p254 = pneg %p253
        $region38: #{tpu_custom_call.1} parent=27 // pred_check_branch
          %256 = sbr.rel (%p254) target = $region40
        $region39: #{tpu_custom_call.1} parent=27 // pred_region
          %257 = vst [vmem:[#allocation2] sm:$0xff] 0.0
          %258 = vst [vmem:[#allocation3] sm:$0xff] 0.0
          %259 = vst [vmem:[#allocation4] sm:$0xff] 0.0
        $region40: #{tpu_custom_call.1} parent=27 // pred_fallthru
          _
        %v260 = vld [vmem:[%s212] sm:$0xff]
        %v261 = vld [vmem:[%s221] sm:$0xf]
        %v262 = vunpack.c.l.bf16 %v261
        %v263 = vand.u32 2147483647, %v260
        %v264 = vsub.f32 0.0, %v263
        %v265 = vmul.f32 %v264, 1.442695
        %v266 = vpow.pop %v265
        %v267 = vadd.f32 %v266, 1.0
        %v268 = vlog2.pop %v267
        %v269 = vmul.f32 %v268, 0.6931472
        %v270 = vmax.f32 %v260, 0.0
        %v271 = vmul.f32 %v260, %v262
        %v272 = vsub.f32 %v270, %v271
        %v273 = vadd.f32 %v272, %v269
        %v274 = vpack.c.bf16 %v273, %v273
        %275 = vst [vmem:[%s246] sm:$0xf] %v274
        %vm276 = vcmp.ge.f32.partialorder %v260, 0.0
        %v277 = vsel %vm276, 1.0, %v266
        %v278 = vrcp.pop %v267
        %v279 = vmul.f32 %v277, %v278
        %v280 = vld [vmem:[#allocation2] sm:$0xff]
        %v281 = vmul.f32 %v279, %v262
        %v282 = vadd.f32 %v281, 0.0
        %v283 = vadd.f32 %v280, %v282
        %284 = vst [vmem:[#allocation2] sm:$0xff] %v283
        %v285 = vld [vmem:[#allocation3] sm:$0xff]
        %v286 = vmul.f32 %v279, %v279
        %v287 = vadd.f32 %v286, 0.0
        %v288 = vadd.f32 %v285, %v287
        %289 = vst [vmem:[#allocation3] sm:$0xff] %v288
        %v290 = vld [vmem:[#allocation4] sm:$0xff]
        %v291 = vadd.f32 %v262, 0.0
        %v292 = vadd.f32 %v290, %v291
        %293 = vst [vmem:[#allocation4] sm:$0xff] %v292
        // Predicated region
        $region41: #{tpu_custom_call.1} parent=27 // pred_check
          %p294 = pneg %p253
        $region42: #{tpu_custom_call.1} parent=27 // pred_check_branch
          %296 = sbr.rel (%p294) target = $region44
        $region43: #{tpu_custom_call.1} parent=27 // pred_region
          %v297 = vld [vmem:[#allocation2] sm:$0xff]
          %298 = vadd.xlane.f32.xlu0 %v297
          %v299 = vpop.xlane.xlu0 %298
          %v300 = vrot.slane %v299, 4
          %v301 = vadd.f32 %v299, %v300
          %v302 = vrot.slane %v301, 2
          %v303 = vadd.f32 %v301, %v302
          %v304 = vrot.slane %v303, 1
          %v305 = vadd.f32 %v303, %v304
          %s306 = vtos %v305
          %v307 = vld [vmem:[#allocation3] sm:$0xff]
          %308 = vadd.xlane.f32.xlu0 %v307
          %v309 = vpop.xlane.xlu0 %308
          %v310 = vrot.slane %v309, 4
          %v311 = vadd.f32 %v309, %v310
          %v312 = vrot.slane %v311, 2
          %v313 = vadd.f32 %v311, %v312
          %v314 = vrot.slane %v313, 1
          %v315 = vadd.f32 %v313, %v314
          %s316 = vtos %v315
          %v317 = vld [vmem:[#allocation4] sm:$0xff]
          %318 = vadd.xlane.f32.xlu0 %v317
          %v319 = vpop.xlane.xlu0 %318
          %v320 = vrot.slane %v319, 4
          %v321 = vadd.f32 %v319, %v320
          %v322 = vrot.slane %v321, 2
          %v323 = vadd.f32 %v321, %v322
          %v324 = vrot.slane %v323, 1
          %v325 = vadd.f32 %v323, %v324
          %s326 = vtos %v325
          %s327 = smul.f32 %s306, 2.0
          %s328 = sadd.f32 %s316, %s326
          %s329 = sadd.f32 %s328, 1e-05
          %v330 = vstv %s329
          %v331 = vrcp.pop %v330
          %s332 = vtos %v331
          %s333 = smul.f32 %s327, %s332
          %s334 = ssub.f32 1.0, %s333
          %v335 = vstv %s334
          %336 = vst [vmem:[%s252] sm:$0x1] %v335
        $region44: #{tpu_custom_call.1} parent=27 // pred_fallthru
          _
        %s337 = sand.u32 %s105, 1
        %s338 = scalar_lea.sflag [#allocation7], %s337
        %s339 = sand.u32 %s105, 1
        %s340 = smul.addr %s339, 4
        %s341 = scalar_lea.vmem [#allocation10], %s340
        %s342 = sand.u32 %s131, 1
        %s343 = scalar_lea.sflag [#allocation12], %s342
        %s344 = sand.u32 %s131, 1
        %s345 = scalar_lea.vmem [#allocation11], %s344
        // Predicated region
        $region45: #{tpu_custom_call.1} parent=27 // pred_check
          %p346 = pneg %p115
        $region46: #{tpu_custom_call.1} parent=27 // pred_check_branch
          %348 = sbr.rel (%p346) target = $region48
        $region47: #{tpu_custom_call.1} parent=27 // pred_region
          %s350 = ssub.s32 64, 64
          %351 = vsyncadd %s338, %s350
          %s352 = sadd.s32 %s32, %s31
          %s353 = smul.addr %s352, 64
          %s354 = scalar_lea.hbm %s2, %s353
          %s356 = sshll.u32 %s341, 4
          %s357 = int_to_ptr.vmem [resolvable:$true] %s356
          %359 = dma.vmem_to_hbm [thread:$0]  %s357, 64, %s354, %s338
        $region48: #{tpu_custom_call.1} parent=27 // pred_fallthru
          _
        // Predicated region
        $region49: #{tpu_custom_call.1} parent=27 // pred_check
          %p360 = pneg %p141
        $region50: #{tpu_custom_call.1} parent=27 // pred_check_branch
          %362 = sbr.rel (%p360) target = $region52
        $region51: #{tpu_custom_call.1} parent=27 // pred_region
          %s364 = ssub.s32 16, 16
          %365 = vsyncadd %s343, %s364
          %s366 = smul.addr %s31, 16
          %s367 = scalar_lea.hbm %s3, %s366
          %s369 = sshll.u32 %s345, 4
          %s370 = int_to_ptr.vmem [resolvable:$true] %s369
          %372 = dma.vmem_to_hbm [thread:$0]  %s370, 16, %s367, %s343
        $region52: #{tpu_custom_call.1} parent=27 // pred_fallthru
          _
      $region28: #{tpu_custom_call.1} parent=5 // pred_fallthru
        _
      %p373 = scmp.le.s32.totalorder 2, %s22
      // Predicated region
      $region53: #{tpu_custom_call.1} parent=5 // pred_check
        %p374 = pneg %p373
      $region54: #{tpu_custom_call.1} parent=5 // pred_check_branch
        %376 = sbr.rel (%p374) target = $region56
      $region55: #{tpu_custom_call.1} parent=5 // pred_region
        %s377 = ssub.s32 %s22, 2
        // Predicated region
        $region57: #{tpu_custom_call.1} parent=55 // pred_check
          %p378 = pneg %p121
        $region58: #{tpu_custom_call.1} parent=55 // pred_check_branch
          %380 = sbr.rel (%p378) target = $region60
        $region59: #{tpu_custom_call.1} parent=55 // pred_region
          %s381 = sand.u32 %s106, 1
          %s382 = scalar_lea.sflag [#allocation7], %s381
          %s383 = sand.u32 %s106, 1
          %s384 = smul.addr %s383, 4
          %s385 = scalar_lea.vmem [#allocation10], %s384
          %386 = dma.done %s382, 64
        $region60: #{tpu_custom_call.1} parent=55 // pred_fallthru
          _
        // Predicated region
        $region61: #{tpu_custom_call.1} parent=55 // pred_check
          %p387 = pneg %p147
        $region62: #{tpu_custom_call.1} parent=55 // pred_check_branch
          %389 = sbr.rel (%p387) target = $region64
        $region63: #{tpu_custom_call.1} parent=55 // pred_region
          %s390 = sand.u32 %s132, 1
          %s391 = scalar_lea.sflag [#allocation12], %s390
          %s392 = sand.u32 %s132, 1
          %s393 = scalar_lea.vmem [#allocation11], %s392
          %394 = dma.done %s391, 16
        $region64: #{tpu_custom_call.1} parent=55 // pred_fallthru
          _
      $region56: #{tpu_custom_call.1} parent=5 // pred_fallthru
        _
    $region6: #{tpu_custom_call.1} parent=1 // loop_footer
      %s26 = sadd.s32 1, %s22
    $region7: #{tpu_custom_call.1} parent=1 // loop_footer_branch
      %21 = sbr.rel target = $region3
    $region8: #{tpu_custom_call.1} parent=1 // loop_exit
      _
    %395 = vsyncpa [#allocation6], 1
    %s396 = scalar_lea.sflag [#allocation6], 1
    %397 = vsyncpa %s396, 1
    %398 = vsyncpa [#allocation9], 1
    %s399 = scalar_lea.sflag [#allocation9], 1
    %400 = vsyncpa %s399, 1
    %401 = vsyncpa [#allocation7], 1
    %s402 = scalar_lea.sflag [#allocation7], 1
    %403 = vsyncpa %s402, 1
    %404 = vsyncpa [#allocation12], 1
    %s405 = scalar_lea.sflag [#allocation12], 1
    %406 = vsyncpa %s405, 1

</llo_original>
